<compile_context>
chip_gen: v6e
topology: v6e:2x2x1
jax: 0.10.0
libtpu: 0.0.40
codegen_flags: <defaults>
</compile_context>

<pallas_src>
import jax
import jax.numpy as jnp
from jax.experimental import pallas as pl
from jax.experimental.pallas import tpu as pltpu


_TILE_BYTES = 2 * 1024 * 1024  # ~2 MiB per x1/out tile; double-buffered x1+out
                               # => ~8 MiB live VMEM, safe on v5e/v6e/v7x.


def _prod(xs):
    out = 1
    for x in xs:
        out *= int(x)
    return out


def _round_up(x, m):
    return ((x + m - 1) // m) * m


def _sublane(dtype):
    # sublane granularity by packing: 32-bit -> 8, 16-bit -> 16, 8-bit -> 32
    return {4: 8, 2: 16, 1: 32}.get(jnp.dtype(dtype).itemsize, 8)


def _pick_tiles(rows, cols, dtype):
    """Row/lane tile sizes: lane-dense (multiple of 128), row tile a multiple of
    the sublane packing, capped so each tile is ~_TILE_BYTES."""
    itemsize = jnp.dtype(dtype).itemsize
    sub = _sublane(dtype)
    tr = min(_round_up(rows, sub), 32 * sub)          # e.g. 256 rows for f32
    tc_budget = max(512, (_TILE_BYTES // (tr * itemsize)) // 128 * 128)
    tc = min(_round_up(cols, 128), tc_budget)         # always a multiple of 128
    return tr, tc


def _compiler_params():
    return pltpu.CompilerParams(
        dimension_semantics=("parallel", "parallel"),
        vmem_limit_bytes=32 * 1024 * 1024,
    )


def _max_bcast_kernel(x1_ref, x2_ref, o_ref):
    # x1_ref: (TR, TC) tile of flattened features; x2_ref: (TR, 1) per-row values
    o_ref[...] = jnp.maximum(x1_ref[...], x2_ref[...])


def _max_same_kernel(x1_ref, x2_ref, o_ref):
    o_ref[...] = jnp.maximum(x1_ref[...], x2_ref[...])


def _fusion_max_rows(x1_2d, x2_col, in_place=False):
    """max(x1_2d, x2_col) with x2 broadcast across the lane dim."""
    rows, cols = x1_2d.shape
    tr, tc = _pick_tiles(rows, cols, x1_2d.dtype)
    grid = (pl.cdiv(rows, tr), pl.cdiv(cols, tc))
    return pl.pallas_call(
        _max_bcast_kernel,
        out_shape=jax.ShapeDtypeStruct((rows, cols), x1_2d.dtype),
        grid=grid,
        in_specs=[
            pl.BlockSpec((tr, tc), lambda i, j: (i, j)),
            pl.BlockSpec((tr, 1), lambda i, j: (i, 0)),
        ],
        out_specs=pl.BlockSpec((tr, tc), lambda i, j: (i, j)),
        compiler_params=_compiler_params(),
        input_output_aliases=({0: 0} if in_place else {}),
    )(x1_2d, x2_col)


def _fusion_max_same(x1_2d, x2_2d, in_place=False):
    """Elementwise max of two identically shaped 2-D slabs."""
    rows, cols = x1_2d.shape
    tr, tc = _pick_tiles(rows, cols, x1_2d.dtype)
    grid = (pl.cdiv(rows, tr), pl.cdiv(cols, tc))
    return pl.pallas_call(
        _max_same_kernel,
        out_shape=jax.ShapeDtypeStruct((rows, cols), x1_2d.dtype),
        grid=grid,
        in_specs=[
            pl.BlockSpec((tr, tc), lambda i, j: (i, j)),
            pl.BlockSpec((tr, tc), lambda i, j: (i, j)),
        ],
        out_specs=pl.BlockSpec((tr, tc), lambda i, j: (i, j)),
        compiler_params=_compiler_params(),
        input_output_aliases=({0: 0} if in_place else {}),
    )(x1_2d, x2_2d)


def _flatten_lane_dense(shape):
    """Split `shape` into (lead, last) with `last` a large, lane-friendly merge
    of trailing dims (free contiguous reshape)."""
    if len(shape) == 0:
        return 1, 1
    if len(shape) == 1:
        return 1, int(shape[0])
    last = int(shape[-1])
    i = len(shape) - 1
    while i > 1 and (last % 128 != 0 or last < 512):
        i -= 1
        last *= int(shape[i])
    return _prod(shape[:i]), last


def fusion_max(x1, x2, x2_mask=None, x2_proj=None, in_place=False):
    """Pallas implementation of FusionMax.forward: max(x1, x2).

    Matches the PyTorch module: if shapes AND ndims differ, x2 is (optionally
    projected then) unsqueezed twice and broadcast over the spatial dims.
    x2_mask is unused by FusionMax (kept for signature parity).
    """
    del x2_mask
    if x1.shape != x2.shape and x1.ndim != x2.ndim:
        # tile_x2 path: x2 -> x2[..., None, None], broadcast over last two dims.
        if x2_proj is not None:
            x2 = x2_proj(x2)
        x2 = x2.astype(x1.dtype)
        lead_shape = x1.shape[:-2]
        if x2.shape != lead_shape:
            # e.g. x2 is (C,) against x1 (B, C, H, W): tiny broadcast in plain JAX
            x2 = jnp.broadcast_to(x2, lead_shape)
        rows = _prod(lead_shape)
        spatial = int(x1.shape[-2]) * int(x1.shape[-1])
        out = _fusion_max_rows(
            x1.reshape(rows, spatial), x2.reshape(rows, 1), in_place=in_place
        )
        return out.reshape(x1.shape)

    # torch.max(x1, x2) semantics (shapes equal, or same-ndim broadcast).
    dtype = jnp.result_type(x1.dtype, x2.dtype)
    x1 = x1.astype(dtype)
    x2 = x2.astype(dtype)
    if x1.shape == x2.shape:
        lead, last = _flatten_lane_dense(x1.shape)
        out = _fusion_max_same(
            x1.reshape(lead, last), x2.reshape(lead, last), in_place=in_place
        )
        return out.reshape(x1.shape)

    out_shape = jnp.broadcast_shapes(x1.shape, x2.shape)
    # Same-ndim per-(batch,channel) scalars (e.g. x2 is [B, C, 1, 1]) reuse the
    # column-broadcast kernel instead of materializing the broadcast.
    if (
        x1.ndim >= 3
        and out_shape == x1.shape
        and x2.shape[: x1.ndim - 2] == x1.shape[: x1.ndim - 2]
        and all(int(d) == 1 for d in x2.shape[x1.ndim - 2 :])
    ):
        rows = _prod(x1.shape[:-2])
        spatial = int(x1.shape[-2]) * int(x1.shape[-1])
        out = _fusion_max_rows(
            x1.reshape(rows, spatial), x2.reshape(rows, 1), in_place=in_place
        )
        return out.reshape(x1.shape)

    # General broadcast fallback (rare): materialize, then elementwise kernel.
    x1b = jnp.broadcast_to(x1, out_shape)
    x2b = jnp.broadcast_to(x2, out_shape)
    lead, last = _flatten_lane_dense(out_shape)
    out = _fusion_max_same(x1b.reshape(lead, last), x2b.reshape(lead, last))
    return out.reshape(out_shape)


if __name__ == "__main__":
    key = jax.random.PRNGKey(0)
    k1, k2, k3 = jax.random.split(key, 3)

    B, C, H, W = 2, 4, 16, 16

    x1 = jax.random.normal(k1, (B, C, H, W), dtype=jnp.float32)
    x2 = jax.random.normal(k2, (B, C), dtype=jnp.float32)

    # Broadcast path (tile_x2): x2 [B, C] -> [B, C, 1, 1]
    out = jax.block_until_ready(fusion_max(x1, x2))
    ref = jnp.maximum(x1, x2[:, :, None, None])
    assert out.shape == x1.shape and out.dtype == x1.dtype
    assert jnp.allclose(out, ref, atol=1e-6, rtol=1e-6)

    # Same-shape path
    x2_full = jax.random.normal(k3, (B, C, H, W), dtype=jnp.float32)
    out2 = jax.block_until_ready(fusion_max(x1, x2_full))
    assert jnp.allclose(out2, jnp.maximum(x1, x2_full), atol=1e-6, rtol=1e-6)

    # Same-ndim [B, C, 1, 1] broadcast dispatches to the column kernel
    out3 = jax.block_until_ready(fusion_max(x1, x2[:, :, None, None]))
    assert jnp.allclose(out3, ref, atol=1e-6, rtol=1e-6)

    print("KERNEL_OK")
</pallas_src>

<mosaic_0001>
module attributes {stable_mosaic.version = 11 : i64} {
  func.func @_max_bcast_kernel(%arg0: i32, %arg1: i32, %arg2: memref<8x256xf32, #tpu.memory_space<vmem>>, %arg3: memref<8x1xf32, #tpu.memory_space<vmem>>, %arg4: memref<8x256xf32, #tpu.memory_space<vmem>>) attributes {dimension_semantics = [#tpu.dimension_semantics<parallel>, #tpu.dimension_semantics<parallel>], iteration_bounds = array<i64: 1, 1>, scalar_prefetch = 0 : i64, scratch_operands = 0 : i64, tpu.core_type = #tpu.core_type<tc>, window_params = [{transform_indices = @transform_0, window_bounds = array<i64: 8, 256>}, {transform_indices = @transform_1, window_bounds = array<i64: 8, 1>}, {transform_indices = @transform_2, window_bounds = array<i64: 8, 256>}]} {
    %c0 = arith.constant 0 : index
    %c0_0 = arith.constant 0 : index
    %0 = vector.load %arg2[%c0, %c0_0] : memref<8x256xf32, #tpu.memory_space<vmem>>, vector<8x256xf32>
    %c0_1 = arith.constant 0 : index
    %c0_2 = arith.constant 0 : index
    %1 = vector.load %arg3[%c0_1, %c0_2] : memref<8x1xf32, #tpu.memory_space<vmem>>, vector<8x1xf32>
    %2 = vector.broadcast %1 : vector<8x1xf32> to vector<8x256xf32>
    %3 = arith.maximumf %0, %2 : vector<8x256xf32>
    %c0_3 = arith.constant 0 : index
    %c0_4 = arith.constant 0 : index
    %4 = vector.load %arg4[%c0_3, %c0_4] : memref<8x256xf32, #tpu.memory_space<vmem>>, vector<8x256xf32>
    tpu.vector_store %arg4[%c0_3, %c0_4], %3 {strides = array<i32>} : memref<8x256xf32, #tpu.memory_space<vmem>>, vector<8x256xf32>,
    return
  }
  func.func @transform_0(%arg0: i32, %arg1: i32) -> (i32, i32) {
    %c0_i32 = arith.constant 0 : i32
    return %arg0, %arg1 : i32, i32
  }
  func.func @transform_1(%arg0: i32, %arg1: i32) -> (i32, i32) {
    %c0_i32 = arith.constant 0 : i32
    %c0_i32_0 = arith.constant 0 : i32
    return %arg0, %c0_i32 : i32, i32
  }
  func.func @transform_2(%arg0: i32, %arg1: i32) -> (i32, i32) {
    %c0_i32 = arith.constant 0 : i32
    return %arg0, %arg1 : i32, i32
  }
}

</mosaic_0001>

<llo_original>
// kernel: tpu_custom_call.1
$region0: #{tpu_custom_call.1}
  #allocation0 [shape = 'u32[]', space=smem, size = 0x4, offset = 0x4, fixed_abs, tag = 'smem constant byte address 0x4 - core index']
  #allocation1 [shape = 'u32[144,128]{1,0:T(1,128)}', space=vmem, size = 0x12000, scoped, tag = 'internal scratch']
  %s0 = inlined_call_operand.hbm [shape: f32[8,256], index: 0, kind: input, shape index: {}]
  %s1 = inlined_call_operand.vmem [shape: f32[8,1], index: 1, kind: input, shape index: {}]
  %s2 = inlined_call_operand.hbm [shape: f32[8,256], index: 2, kind: output, shape index: {}]
  %s3 = sld [smem:[#allocation0]]
  $region22: #{tpu_custom_call.1} parent=0
    _
  %s5 = ssub.s32 1, %s3
  %s6 = scalar_select 0, %s5, %s3
  $region1: #{tpu_custom_call.1} parent=0
    #allocation2 [shape = 'u8[8192]{0}', space=vmem, size = 0x2000, scoped, tag = 'input window, operand 0, single buffered']
    #allocation3 [shape = 's32[1]{0}', space=sflag, size = 0x4, scoped, tag = 'scoped memory for tpu_custom_call.1']
    #allocation4 [shape = 's32[1]{0}', space=sflag, size = 0x4, scoped, tag = 'scoped memory for tpu_custom_call.1']
    #allocation5 [shape = 'u8[8192]{0}', space=vmem, size = 0x2000, scoped, tag = 'output window, operand 0, single buffered']
    %7 = vsyncpa [#allocation3], 0
    %8 = vsyncpa [#allocation4], 0
    // Predicated region
    $region2: #{tpu_custom_call.1} parent=1 // pred_check
      _
    $region3: #{tpu_custom_call.1} parent=1 // pred_check_branch
      %10 = sbr.rel (0) target = $region5
    $region4: #{tpu_custom_call.1} parent=1 // pred_region
      %s12 = ssub.s32 256, 256
      %13 = vsyncadd [#allocation3], %s12
      %s15 = sshll.u32 [#allocation2], 4
      %s16 = int_to_ptr.vmem [resolvable:$true] %s15
      %18 = dma.hbm_to_vmem [thread:$0]  %s0, 256, %s16, [#allocation3]
    $region5: #{tpu_custom_call.1} parent=1 // pred_fallthru
      _
    // Predicated region
    $region6: #{tpu_custom_call.1} parent=1 // pred_check
      _
    $region7: #{tpu_custom_call.1} parent=1 // pred_check_branch
      %20 = sbr.rel (0) target = $region9
    $region8: #{tpu_custom_call.1} parent=1 // pred_region
      _
    $region9: #{tpu_custom_call.1} parent=1 // pred_fallthru
      _
    // Predicated region
    $region10: #{tpu_custom_call.1} parent=1 // pred_check
      _
    $region11: #{tpu_custom_call.1} parent=1 // pred_check_branch
      %22 = sbr.rel (0) target = $region13
    $region12: #{tpu_custom_call.1} parent=1 // pred_region
      %23 = dma.done [#allocation3], 256
    $region13: #{tpu_custom_call.1} parent=1 // pred_fallthru
      _
    %v24 = vld [vmem:[#allocation2] sm:$0xff]
    %v25 = vld [vmem:[#allocation2 + $0x8] sm:$0xff]
    %v26 = vld [vmem:[%s1] sm:$0xff]
    %28 = vset.pattern.permute.xlu0 0
    %29 = vperm.xlu0 %28, %v26
    %v30 = vpop.permute.xlu0 %29
    %v32 = vmax.f32 %v24, %v30
    %v33 = vmax.f32 %v25, %v30
    %34 = vst [vmem:[#allocation5] sm:$0xff] %v32
    %35 = vst [vmem:[#allocation5 + $0x8] sm:$0xff] %v33
    // Predicated region
    $region14: #{tpu_custom_call.1} parent=1 // pred_check
      _
    $region15: #{tpu_custom_call.1} parent=1 // pred_check_branch
      %37 = sbr.rel (0) target = $region17
    $region16: #{tpu_custom_call.1} parent=1 // pred_region
      %s39 = ssub.s32 256, 256
      %40 = vsyncadd [#allocation4], %s39
      %s42 = sshll.u32 [#allocation5], 4
      %s43 = int_to_ptr.vmem [resolvable:$true] %s42
      %45 = dma.vmem_to_hbm [thread:$0]  %s43, 256, %s2, [#allocation4]
    $region17: #{tpu_custom_call.1} parent=1 // pred_fallthru
      _
    // Predicated region
    $region18: #{tpu_custom_call.1} parent=1 // pred_check
      _
    $region19: #{tpu_custom_call.1} parent=1 // pred_check_branch
      %47 = sbr.rel (0) target = $region21
    $region20: #{tpu_custom_call.1} parent=1 // pred_region
      %48 = dma.done [#allocation4], 256
    $region21: #{tpu_custom_call.1} parent=1 // pred_fallthru
      _
    %49 = vsyncpa [#allocation3], 1
    %50 = vsyncpa [#allocation4], 1

</llo_original>
